<compile_context>
chip_gen: v5e
topology: v5e:2x2
jax: 0.10.0
libtpu: 0.0.40
codegen_flags: <defaults>
</compile_context>

<pallas_src>
import jax
import jax.numpy as jnp
import numpy as np
from jax.experimental import pallas as pl
from jax.experimental.pallas import tpu as pltpu


def _chomp1d_kernel(x_ref, o_ref):
    # Copy the kept prefix of the sequence axis; the chomped tail columns of
    # the input tile are never read (static slice inside VMEM).
    o_ref[...] = x_ref[:, : o_ref.shape[-1]]


def _pick_row_tile(n_rows, l_in, l_out, itemsize, *,
                   vmem_budget_bytes=8 << 20, max_rows=1024):
    """Row tile that (a) fits a conservative VMEM budget with double-buffered
    input + output tiles, (b) is sublane-aligned for the dtype unless it covers
    all rows, (c) is capped so big problems still get several grid steps."""
    bytes_per_row = 2 * (l_in + l_out) * itemsize   # x2: double buffering
    tile = vmem_budget_bytes // max(1, bytes_per_row)
    tile = int(min(tile, max_rows, n_rows))
    if tile >= n_rows:
        return n_rows                               # full-extent block is legal
    sub = 8 * max(1, 4 // itemsize)                 # 8 (f32) / 16 (bf16) / 32 (i8)
    tile = max(sub, (tile // sub) * sub)
    return tile


def chomp1d(x, chomp_size, *, max_block_rows=1024):
    """Pallas implementation of Chomp1d.forward for x of shape [N, C, L]."""
    if not (0 < chomp_size < x.shape[-1]):
        raise ValueError("chomp_size must satisfy 0 < chomp_size < L")

    N, C, L = x.shape
    L_out = L - chomp_size
    R = N * C
    x2 = x.reshape(R, L)                            # free: row-major collapse

    itemsize = jnp.dtype(x.dtype).itemsize
    TB = _pick_row_tile(R, L, L_out, itemsize, max_rows=max_block_rows)
    grid = (pl.cdiv(R, TB),)

    # Raise the scoped-VMEM limit only if the double-buffered tiles would not
    # fit the most conservative per-chip default (16 MiB on v5e).
    vmem_needed = 2 * TB * (L + L_out) * itemsize + (1 << 20)
    vmem_limit = min(vmem_needed, 64 << 20) if vmem_needed > (16 << 20) else None
    compiler_params = pltpu.CompilerParams(
        dimension_semantics=("parallel",),
        vmem_limit_bytes=vmem_limit,
    )

    bytes_accessed = (R * L + R * L_out) * itemsize
    out2 = pl.pallas_call(
        _chomp1d_kernel,
        out_shape=jax.ShapeDtypeStruct((R, L_out), x.dtype),
        grid=grid,
        in_specs=[pl.BlockSpec((TB, L), lambda i: (i, 0))],
        out_specs=pl.BlockSpec((TB, L_out), lambda i: (i, 0)),
        compiler_params=compiler_params,
        cost_estimate=pl.CostEstimate(
            flops=0, transcendentals=0, bytes_accessed=bytes_accessed),
    )(x2)
    return out2.reshape(N, C, L_out)


def chomp1d_reference(x, chomp_size):
    return x[:, :, :-chomp_size]


if __name__ == "__main__":
    key = jax.random.PRNGKey(0)
    k1, k2, k3 = jax.random.split(key, 3)

    # 1) Small test consistent with the module: [batch, channels, seq].
    N, C, L, chomp = 2, 4, 16, 4
    x = jax.random.normal(k1, (N, C, L), jnp.float32)
    out = jax.block_until_ready(chomp1d(x, chomp))
    assert out.shape == (N, C, L - chomp)
    np.testing.assert_array_equal(np.asarray(out),
                                  np.asarray(chomp1d_reference(x, chomp)))

    # 2) Multiple grid steps + ragged trailing row block (R=15 with TB=8) and a
    #    non-128-aligned output width (L_out = 243).
    N2, C2, L2, chomp2 = 3, 5, 256, 13
    x2 = jax.random.normal(k2, (N2, C2, L2), jnp.float32)
    out2 = jax.block_until_ready(chomp1d(x2, chomp2, max_block_rows=8))
    assert out2.shape == (N2, C2, L2 - chomp2)
    np.testing.assert_array_equal(np.asarray(out2),
                                  np.asarray(chomp1d_reference(x2, chomp2)))

    # 3) bf16 path (packed dtype, 16-row sublane alignment).
    N3, C3, L3, chomp3 = 2, 4, 128, 5
    x3 = jax.random.normal(k3, (N3, C3, L3), jnp.float32).astype(jnp.bfloat16)
    out3 = jax.block_until_ready(chomp1d(x3, chomp3))
    assert out3.shape == (N3, C3, L3 - chomp3)
    np.testing.assert_array_equal(
        np.asarray(out3.astype(jnp.float32)),
        np.asarray(chomp1d_reference(x3, chomp3).astype(jnp.float32)))

    print("KERNEL_OK")
</pallas_src>

<mosaic_0001>
module attributes {stable_mosaic.version = 11 : i64} {
  func.func @_chomp1d_kernel(%arg0: i32, %arg1: memref<8x16xf32, #tpu.memory_space<vmem>>, %arg2: memref<8x12xf32, #tpu.memory_space<vmem>>) attributes {dimension_semantics = [#tpu.dimension_semantics<parallel>], iteration_bounds = array<i64: 1>, scalar_prefetch = 0 : i64, scratch_operands = 0 : i64, tpu.core_type = #tpu.core_type<tc>, window_params = [{transform_indices = @transform_0, window_bounds = array<i64: 8, 16>}, {transform_indices = @transform_1, window_bounds = array<i64: 8, 12>}]} {
    %c0 = arith.constant 0 : index
    %c0_0 = arith.constant 0 : index
    %0 = vector.load %arg1[%c0, %c0_0] : memref<8x16xf32, #tpu.memory_space<vmem>>, vector<8x12xf32>
    %c0_1 = arith.constant 0 : index
    %c0_2 = arith.constant 0 : index
    %1 = vector.load %arg2[%c0_1, %c0_2] : memref<8x12xf32, #tpu.memory_space<vmem>>, vector<8x12xf32>
    tpu.vector_store %arg2[%c0_1, %c0_2], %0 {strides = array<i32>} : memref<8x12xf32, #tpu.memory_space<vmem>>, vector<8x12xf32>,
    return
  }
  func.func @transform_0(%arg0: i32) -> (i32, i32) {
    %c0_i32 = arith.constant 0 : i32
    %c0_i32_0 = arith.constant 0 : i32
    return %arg0, %c0_i32 : i32, i32
  }
  func.func @transform_1(%arg0: i32) -> (i32, i32) {
    %c0_i32 = arith.constant 0 : i32
    %c0_i32_0 = arith.constant 0 : i32
    return %arg0, %c0_i32 : i32, i32
  }
}

</mosaic_0001>

<llo_original>
// kernel: tpu_custom_call.1
$region0: #{tpu_custom_call.1}
  #allocation0 [shape = 'u32[]', space=smem, size = 0x4, offset = 0x4, fixed_abs, tag = 'smem constant byte address 0x4 - core index']
  #allocation1 [shape = 'u32[72,128]{1,0:T(1,128)}', space=vmem, size = 0x9000, scoped, tag = 'internal scratch']
  %s0 = inlined_call_operand.hbm [shape: f32[8,16], index: 0, kind: input, shape index: {}]
  %s1 = inlined_call_operand.hbm [shape: f32[8,12], index: 1, kind: output, shape index: {}]
  %s2 = sld [smem:[#allocation0]]
  $region18: #{tpu_custom_call.1} parent=0
    _
  %s4 = ssub.s32 1, %s2
  %s5 = scalar_select 0, %s4, %s2
  $region1: #{tpu_custom_call.1} parent=0
    #allocation2 [shape = 'u8[4096]{0}', space=vmem, size = 0x1000, scoped, tag = 'input window, operand 0, single buffered']
    #allocation3 [shape = 's32[1]{0}', space=sflag, size = 0x4, scoped, tag = 'scoped memory for tpu_custom_call.1']
    #allocation4 [shape = 's32[1]{0}', space=sflag, size = 0x4, scoped, tag = 'scoped memory for tpu_custom_call.1']
    #allocation5 [shape = 'u8[4096]{0}', space=vmem, size = 0x1000, scoped, tag = 'output window, operand 0, single buffered']
    %6 = vsyncpa [#allocation3], 0
    %7 = vsyncpa [#allocation4], 0
    // Predicated region
    $region2: #{tpu_custom_call.1} parent=1 // pred_check
      _
    $region3: #{tpu_custom_call.1} parent=1 // pred_check_branch
      %9 = sbr.rel (0) target = $region5
    $region4: #{tpu_custom_call.1} parent=1 // pred_region
      %11 = vsyncadd [#allocation3], 0
      %s13 = sshll.u32 %s0, 4
      %s14 = int_to_ptr.hbm [resolvable:$true] %s13
      %s15 = sshll.u32 [#allocation2], 4
      %s16 = int_to_ptr.vmem [resolvable:$true] %s15
      %18 = dma.hbm_to_vmem [thread:$0]  %s14, 128, %s16, [#allocation3]
    $region5: #{tpu_custom_call.1} parent=1 // pred_fallthru
      _
    // Predicated region
    $region6: #{tpu_custom_call.1} parent=1 // pred_check
      _
    $region7: #{tpu_custom_call.1} parent=1 // pred_check_branch
      %20 = sbr.rel (0) target = $region9
    $region8: #{tpu_custom_call.1} parent=1 // pred_region
      %22 = dma.done [#allocation3], 128
    $region9: #{tpu_custom_call.1} parent=1 // pred_fallthru
      _
    %v23 = vld [vmem:[#allocation2] sm:$0xff]
    %vm24 = vcmask 97280
    %25 = vst.msk [vmem:[#allocation5] sm:$0xff] %vm24, %v23
    // Predicated region
    $region10: #{tpu_custom_call.1} parent=1 // pred_check
      _
    $region11: #{tpu_custom_call.1} parent=1 // pred_check_branch
      %27 = sbr.rel (0) target = $region13
    $region12: #{tpu_custom_call.1} parent=1 // pred_region
      %29 = vsyncadd [#allocation4], 0
      %s31 = sshll.u32 [#allocation5], 4
      %s32 = int_to_ptr.vmem [resolvable:$true] %s31
      %s33 = sshll.u32 %s1, 4
      %s34 = int_to_ptr.hbm [resolvable:$true] %s33
      %36 = dma.vmem_to_hbm [thread:$0]  %s32, 128, %s34, [#allocation4]
    $region13: #{tpu_custom_call.1} parent=1 // pred_fallthru
      _
    // Predicated region
    $region14: #{tpu_custom_call.1} parent=1 // pred_check
      _
    $region15: #{tpu_custom_call.1} parent=1 // pred_check_branch
      %38 = sbr.rel (0) target = $region17
    $region16: #{tpu_custom_call.1} parent=1 // pred_region
      %40 = dma.done [#allocation4], 128
    $region17: #{tpu_custom_call.1} parent=1 // pred_fallthru
      _
    %41 = vsyncpa [#allocation3], 1
    %42 = vsyncpa [#allocation4], 1

</llo_original>
